<compile_context>
chip_gen: v5e
topology: v5e:2x2
jax: 0.10.0
libtpu: 0.0.40
codegen_flags: <defaults>
</compile_context>

<pallas_src>
import functools

import jax
import jax.numpy as jnp
from jax.experimental import pallas as pl
from jax.experimental.pallas import tpu as pltpu


def _round_up(x, m):
    return (x + m - 1) // m * m


def _vmem_cap_bytes():
    # Generation-aware cap: v7x has 64 MiB of physical VMEM per TensorCore,
    # v5e/v6e have 128 MiB.  Leave 25% headroom for Mosaic's own scratch.
    try:
        cap = int(pltpu.get_tpu_info().vmem_capacity_bytes)
    except Exception:
        cap = 128 << 20
    return (cap * 3) // 4


# -----------------------------------------------------------------------------
# Kernel 1: conv for one image.  Input is the space-to-depth'd padded image
# (stride-1 conv with kernel Kp = ceil(K/s) and Cs = s*s*Cin channels).  The
# Kp*Kp contiguous window slices are matmul'd against the resident weight and
# accumulated in f32.  Optionally emits per-image BN partial stats.
# -----------------------------------------------------------------------------
def _conv_kernel(x_ref, w_ref, y_ref, *rest, oh, ow, kp, cs, with_stats):
    acc = None
    for qi in range(kp):
        for qj in range(kp):
            xs = x_ref[0, qi:qi + oh, qj:qj + ow, :].reshape(oh * ow, cs)
            t = jnp.dot(xs, w_ref[qi, qj], preferred_element_type=jnp.float32)
            acc = t if acc is None else acc + t

    yb = acc.astype(y_ref.dtype)          # bf16 intermediate (halved HBM traffic)
    y_ref[0] = yb

    if with_stats:
        stats_ref = rest[0]
        # Stats from the *same* bf16-rounded values the epilogue will normalize.
        yf = yb.astype(jnp.float32)
        s = jnp.sum(yf, axis=0, keepdims=True)        # (1, Cp)
        sq = jnp.sum(yf * yf, axis=0, keepdims=True)  # (1, Cp)
        r = jax.lax.broadcasted_iota(jnp.int32, (8, yf.shape[1]), 0)
        stats_ref[0] = jnp.where(r == 0, s, 0.0) + jnp.where(r == 1, sq, 0.0)


# -----------------------------------------------------------------------------
# Kernel 2: fused affine epilogue (precomputed BN scale/shift, or the conv bias
# when normalize=False) + LeakyReLU.  Pure streaming pass over one image.
# -----------------------------------------------------------------------------
def _bn_act_kernel(y_ref, scale_ref, shift_ref, o_ref, *, slope):
    y = y_ref[0].astype(jnp.float32)          # (M, Cp)
    y = y * scale_ref[0] + shift_ref[0]       # (1, Cp) broadcasts
    o_ref[0] = jnp.where(y >= 0, y, slope * y).astype(o_ref.dtype)


# -----------------------------------------------------------------------------
# Wrapper: semantics identical to the PyTorch module (Conv2d + training-mode
# BatchNorm2d with biased batch variance + LeakyReLU(0.2)).
# -----------------------------------------------------------------------------
def dis_block(x_nchw, w, b, gamma, beta, *, stride, padding, normalize=True,
              eps=1e-5, slope=0.2, out_dtype=jnp.float32, nhwc_output=False):
    N, Cin, H, W = x_nchw.shape
    Cout, _, K, _ = w.shape
    s = stride
    OH = (H + 2 * padding - K) // s + 1
    OW = (W + 2 * padding - K) // s + 1
    M = OH * OW
    Kp = -(-K // s)                 # kernel size after space-to-depth
    K2 = Kp * s                     # weights zero-padded to a multiple of s
    Cs = s * s * Cin                # channels after space-to-depth
    Cp = _round_up(Cout, 128)       # lane-dense output channels

    # ---- glue: NCHW -> NHWC, spatial zero-pad, space-to-depth by the stride ----
    x = jnp.transpose(x_nchw, (0, 2, 3, 1)).astype(jnp.bfloat16)
    Hq = max(OH + Kp - 1, -(-(H + 2 * padding) // s))
    Wq = max(OW + Kp - 1, -(-(W + 2 * padding) // s))
    hpad = Hq * s - H - padding     # bottom pad (>= padding)
    wpad = Wq * s - W - padding
    xp = jnp.pad(x, ((0, 0), (padding, hpad), (padding, wpad), (0, 0)))
    if s == 1:
        xs2d = xp                                        # (N, Hq, Wq, Cin)
    else:
        xs2d = xp.reshape(N, Hq, s, Wq, s, Cin)
        xs2d = jnp.transpose(xs2d, (0, 1, 3, 2, 4, 5)).reshape(N, Hq, Wq, Cs)

    # ---- weights: (Cout, Cin, K, K) -> (Kp, Kp, s*s*Cin, Cp), zero-padded ----
    wt = jnp.transpose(w, (2, 3, 1, 0)).astype(jnp.float32)        # (K, K, Cin, Cout)
    wt = jnp.pad(wt, ((0, K2 - K), (0, K2 - K), (0, 0), (0, Cp - Cout)))
    wt = wt.reshape(Kp, s, Kp, s, Cin, Cp)
    wt = jnp.transpose(wt, (0, 2, 1, 3, 4, 5)).reshape(Kp, Kp, Cs, Cp)
    wt = wt.astype(jnp.bfloat16)

    with_stats = bool(normalize)
    cap = _vmem_cap_bytes()

    # ---- Pallas call 1: per-image conv (+ optional BN partial stats) ----
    x_bytes = Hq * Wq * Cs * 2
    w_bytes = Kp * Kp * Cs * Cp * 2
    y_bytes = M * Cp * 2
    st_bytes = 8 * Cp * 4
    acc_bytes = M * Cp * 4
    vmem_conv = int(min(cap, max(16 << 20,
        2 * (x_bytes + w_bytes + y_bytes + st_bytes) + 2 * acc_bytes + (2 << 20))))

    if with_stats:
        conv_out_shape = (jax.ShapeDtypeStruct((N, M, Cp), jnp.bfloat16),
                          jax.ShapeDtypeStruct((N, 8, Cp), jnp.float32))
        conv_out_specs = (pl.BlockSpec((1, M, Cp), lambda n: (n, 0, 0)),
                          pl.BlockSpec((1, 8, Cp), lambda n: (n, 0, 0)))
    else:
        conv_out_shape = jax.ShapeDtypeStruct((N, M, Cp), jnp.bfloat16)
        conv_out_specs = pl.BlockSpec((1, M, Cp), lambda n: (n, 0, 0))

    conv_fn = pl.pallas_call(
        functools.partial(_conv_kernel, oh=OH, ow=OW, kp=Kp, cs=Cs,
                          with_stats=with_stats),
        out_shape=conv_out_shape,
        grid_spec=pltpu.PrefetchScalarGridSpec(
            num_scalar_prefetch=0,
            grid=(N,),
            in_specs=[
                # full per-image s2d slab (last two dims are full -> no (8,128) rule)
                pl.BlockSpec((1, Hq, Wq, Cs), lambda n: (n, 0, 0, 0)),
                # full weight, constant index_map -> resident in VMEM for the grid
                pl.BlockSpec((Kp, Kp, Cs, Cp), lambda n: (0, 0, 0, 0)),
            ],
            out_specs=conv_out_specs),
        compiler_params=pltpu.CompilerParams(
            dimension_semantics=("parallel",),
            vmem_limit_bytes=vmem_conv),
    )
    res = conv_fn(xs2d, wt)
    if with_stats:
        y, stats = res
    else:
        y, stats = res, None

    # ---- tiny per-channel reduction + scale/shift precompute (plain JAX) ----
    if normalize:
        cnt = float(N * M)
        s_sum = jnp.sum(stats[:, 0, :], axis=0)                    # (Cp,)
        s_sq = jnp.sum(stats[:, 1, :], axis=0)                     # (Cp,)
        mean = s_sum / cnt
        var = jnp.maximum(s_sq / cnt - mean * mean, 0.0)           # biased var
        g = jnp.pad(gamma.astype(jnp.float32), (0, Cp - Cout))
        bt = jnp.pad(beta.astype(jnp.float32), (0, Cp - Cout))
        scale = g * jax.lax.rsqrt(var + eps)
        # Conv bias cancels exactly under batch-norm mean subtraction -> dropped.
        shift = bt - mean * scale
    else:
        scale = jnp.ones((Cp,), jnp.float32)
        shift = jnp.pad(b.astype(jnp.float32), (0, Cp - Cout))
    scale = scale.reshape(1, 1, Cp)
    shift = shift.reshape(1, 1, Cp)

    # ---- Pallas call 2: fused scale*y + shift, then LeakyReLU ----
    o_bytes = M * Cp * jnp.dtype(out_dtype).itemsize
    vmem_bn = int(min(cap, max(16 << 20,
        2 * (y_bytes + o_bytes) + 4 * Cp * 8 + (2 << 20))))
    bn_fn = pl.pallas_call(
        functools.partial(_bn_act_kernel, slope=slope),
        out_shape=jax.ShapeDtypeStruct((N, M, Cp), out_dtype),
        grid_spec=pltpu.PrefetchScalarGridSpec(
            num_scalar_prefetch=0,
            grid=(N,),
            in_specs=[pl.BlockSpec((1, M, Cp), lambda n: (n, 0, 0)),
                      pl.BlockSpec((1, 1, Cp), lambda n: (0, 0, 0)),
                      pl.BlockSpec((1, 1, Cp), lambda n: (0, 0, 0))],
            out_specs=pl.BlockSpec((1, M, Cp), lambda n: (n, 0, 0))),
        compiler_params=pltpu.CompilerParams(
            dimension_semantics=("parallel",),
            vmem_limit_bytes=vmem_bn),
    )
    out = bn_fn(y, scale, shift)

    # ---- glue: slice Cout, reshape; keep NHWC for chained blocks if requested ----
    out = out[:, :, :Cout].reshape(N, OH, OW, Cout)
    if nhwc_output:
        return out
    return jnp.transpose(out, (0, 3, 1, 2))


# -----------------------------------------------------------------------------
# Reference in plain JAX (mirrors the PyTorch forward for validation)
# -----------------------------------------------------------------------------
def _reference(x, w, b, gamma, beta, *, stride, padding, normalize,
               eps=1e-5, slope=0.2):
    y = jax.lax.conv_general_dilated(
        x.astype(jnp.float32), w.astype(jnp.float32),
        window_strides=(stride, stride),
        padding=((padding, padding), (padding, padding)),
        dimension_numbers=('NCHW', 'OIHW', 'NCHW'))
    y = y + b.reshape(1, -1, 1, 1)
    if normalize:
        mean = jnp.mean(y, axis=(0, 2, 3), keepdims=True)
        var = jnp.mean((y - mean) ** 2, axis=(0, 2, 3), keepdims=True)
        y = (y - mean) / jnp.sqrt(var + eps) * gamma.reshape(1, -1, 1, 1) \
            + beta.reshape(1, -1, 1, 1)
    return jnp.where(y >= 0, y, slope * y)


if __name__ == "__main__":
    # DISBlock(i_channels=4, o_channels=8, k_size=4, stride=2, padding=1,
    #          normalize=True, activation=nn.LeakyReLU(0.2))
    N, Cin, H, W = 2, 4, 16, 16
    Cout, K, stride, padding = 8, 4, 2, 1

    key = jax.random.PRNGKey(0)
    kx, kw, kb, kg, kbt = jax.random.split(key, 5)
    x = jax.random.normal(kx, (N, Cin, H, W), dtype=jnp.float32)
    w = jax.random.normal(kw, (Cout, Cin, K, K), dtype=jnp.float32) * 0.1
    b = jax.random.normal(kb, (Cout,), dtype=jnp.float32) * 0.1
    gamma = 1.0 + 0.1 * jax.random.normal(kg, (Cout,), dtype=jnp.float32)
    beta = 0.1 * jax.random.normal(kbt, (Cout,), dtype=jnp.float32)

    # normalize=True path (Conv -> BatchNorm(train stats) -> LeakyReLU)
    out = dis_block(x, w, b, gamma, beta, stride=stride, padding=padding,
                    normalize=True)
    out = jax.block_until_ready(out)
    ref = _reference(x, w, b, gamma, beta, stride=stride, padding=padding,
                     normalize=True)
    assert out.shape == ref.shape, (out.shape, ref.shape)
    err = float(jnp.max(jnp.abs(out - ref)))
    # bf16 inputs/intermediate on the MXU -> looser tolerance than pure f32.
    assert jnp.allclose(out, ref, rtol=5e-2, atol=5e-2), err

    # normalize=False path (Conv + bias -> LeakyReLU), exercises the stats-free kernel
    out2 = dis_block(x, w, b, gamma, beta, stride=stride, padding=padding,
                     normalize=False)
    out2 = jax.block_until_ready(out2)
    ref2 = _reference(x, w, b, gamma, beta, stride=stride, padding=padding,
                      normalize=False)
    err2 = float(jnp.max(jnp.abs(out2 - ref2)))
    assert jnp.allclose(out2, ref2, rtol=5e-2, atol=5e-2), err2

    print("KERNEL_OK")
</pallas_src>

<mosaic_0001>
module attributes {stable_mosaic.version = 11 : i64} {
  func.func @_conv_kernel(%arg0: i32, %arg1: memref<1x9x9x16xbf16, #tpu.memory_space<vmem>>, %arg2: memref<2x2x16x128xbf16, #tpu.memory_space<vmem>>, %arg3: memref<1x64x128xbf16, #tpu.memory_space<vmem>>, %arg4: memref<1x8x128xf32, #tpu.memory_space<vmem>>) attributes {dimension_semantics = [#tpu.dimension_semantics<parallel>], iteration_bounds = array<i64: 2>, scalar_prefetch = 0 : i64, scratch_operands = 0 : i64, tpu.core_type = #tpu.core_type<tc>, window_params = [{transform_indices = @transform_0, window_bounds = array<i64: 1, 9, 9, 16>}, {pipeline_mode = #tpu.pipeline_mode<synchronous>, transform_indices = @transform_1, window_bounds = array<i64: 2, 2, 16, 128>}, {transform_indices = @transform_2, window_bounds = array<i64: 1, 64, 128>}, {transform_indices = @transform_3, window_bounds = array<i64: 1, 8, 128>}]} {
    %c0 = arith.constant 0 : index
    %c0_0 = arith.constant 0 : index
    %c0_1 = arith.constant 0 : index
    %c0_2 = arith.constant 0 : index
    %0 = vector.load %arg1[%c0, %c0_0, %c0_1, %c0_2] : memref<1x9x9x16xbf16, #tpu.memory_space<vmem>>, vector<1x8x8x16xbf16>
    %1 = vector.shape_cast %0 : vector<1x8x8x16xbf16> to vector<8x8x16xbf16>
    %2 = vector.shape_cast %1 : vector<8x8x16xbf16> to vector<64x16xbf16>
    %c0_3 = arith.constant 0 : index
    %c0_4 = arith.constant 0 : index
    %c0_5 = arith.constant 0 : index
    %c0_6 = arith.constant 0 : index
    %3 = vector.load %arg2[%c0_3, %c0_4, %c0_5, %c0_6] : memref<2x2x16x128xbf16, #tpu.memory_space<vmem>>, vector<1x1x16x128xbf16>
    %4 = vector.shape_cast %3 : vector<1x1x16x128xbf16> to vector<16x128xbf16>
    %cst = arith.constant dense<0.000000e+00> : vector<64x128xf32>
    %5 = tpu.matmul %2, %4, %cst {dimension_numbers = #tpu.dot_dimension_numbers<[1], [0], [0], [1], [0, 0, 1, 1], [], []>} : vector<64x16xbf16>, vector<16x128xbf16>, vector<64x128xf32> -> vector<64x128xf32>
    %c0_7 = arith.constant 0 : index
    %c0_8 = arith.constant 0 : index
    %c1 = arith.constant 1 : index
    %c0_9 = arith.constant 0 : index
    %6 = vector.load %arg1[%c0_7, %c0_8, %c1, %c0_9] : memref<1x9x9x16xbf16, #tpu.memory_space<vmem>>, vector<1x8x8x16xbf16>
    %7 = vector.shape_cast %6 : vector<1x8x8x16xbf16> to vector<8x8x16xbf16>
    %8 = vector.shape_cast %7 : vector<8x8x16xbf16> to vector<64x16xbf16>
    %c0_10 = arith.constant 0 : index
    %c1_11 = arith.constant 1 : index
    %c0_12 = arith.constant 0 : index
    %c0_13 = arith.constant 0 : index
    %9 = vector.load %arg2[%c0_10, %c1_11, %c0_12, %c0_13] : memref<2x2x16x128xbf16, #tpu.memory_space<vmem>>, vector<1x1x16x128xbf16>
    %10 = vector.shape_cast %9 : vector<1x1x16x128xbf16> to vector<16x128xbf16>
    %cst_14 = arith.constant dense<0.000000e+00> : vector<64x128xf32>
    %11 = tpu.matmul %8, %10, %cst_14 {dimension_numbers = #tpu.dot_dimension_numbers<[1], [0], [0], [1], [0, 0, 1, 1], [], []>} : vector<64x16xbf16>, vector<16x128xbf16>, vector<64x128xf32> -> vector<64x128xf32>
    %12 = arith.addf %5, %11 : vector<64x128xf32>
    %c0_15 = arith.constant 0 : index
    %c1_16 = arith.constant 1 : index
    %c0_17 = arith.constant 0 : index
    %c0_18 = arith.constant 0 : index
    %13 = vector.load %arg1[%c0_15, %c1_16, %c0_17, %c0_18] : memref<1x9x9x16xbf16, #tpu.memory_space<vmem>>, vector<1x8x8x16xbf16>
    %14 = vector.shape_cast %13 : vector<1x8x8x16xbf16> to vector<8x8x16xbf16>
    %15 = vector.shape_cast %14 : vector<8x8x16xbf16> to vector<64x16xbf16>
    %c1_19 = arith.constant 1 : index
    %c0_20 = arith.constant 0 : index
    %c0_21 = arith.constant 0 : index
    %c0_22 = arith.constant 0 : index
    %16 = vector.load %arg2[%c1_19, %c0_20, %c0_21, %c0_22] : memref<2x2x16x128xbf16, #tpu.memory_space<vmem>>, vector<1x1x16x128xbf16>
    %17 = vector.shape_cast %16 : vector<1x1x16x128xbf16> to vector<16x128xbf16>
    %cst_23 = arith.constant dense<0.000000e+00> : vector<64x128xf32>
    %18 = tpu.matmul %15, %17, %cst_23 {dimension_numbers = #tpu.dot_dimension_numbers<[1], [0], [0], [1], [0, 0, 1, 1], [], []>} : vector<64x16xbf16>, vector<16x128xbf16>, vector<64x128xf32> -> vector<64x128xf32>
    %19 = arith.addf %12, %18 : vector<64x128xf32>
    %c0_24 = arith.constant 0 : index
    %c1_25 = arith.constant 1 : index
    %c1_26 = arith.constant 1 : index
    %c0_27 = arith.constant 0 : index
    %20 = vector.load %arg1[%c0_24, %c1_25, %c1_26, %c0_27] : memref<1x9x9x16xbf16, #tpu.memory_space<vmem>>, vector<1x8x8x16xbf16>
    %21 = vector.shape_cast %20 : vector<1x8x8x16xbf16> to vector<8x8x16xbf16>
    %22 = vector.shape_cast %21 : vector<8x8x16xbf16> to vector<64x16xbf16>
    %c1_28 = arith.constant 1 : index
    %c1_29 = arith.constant 1 : index
    %c0_30 = arith.constant 0 : index
    %c0_31 = arith.constant 0 : index
    %23 = vector.load %arg2[%c1_28, %c1_29, %c0_30, %c0_31] : memref<2x2x16x128xbf16, #tpu.memory_space<vmem>>, vector<1x1x16x128xbf16>
    %24 = vector.shape_cast %23 : vector<1x1x16x128xbf16> to vector<16x128xbf16>
    %cst_32 = arith.constant dense<0.000000e+00> : vector<64x128xf32>
    %25 = tpu.matmul %22, %24, %cst_32 {dimension_numbers = #tpu.dot_dimension_numbers<[1], [0], [0], [1], [0, 0, 1, 1], [], []>} : vector<64x16xbf16>, vector<16x128xbf16>, vector<64x128xf32> -> vector<64x128xf32>
    %26 = arith.addf %19, %25 : vector<64x128xf32>
    %27 = arith.truncf %26 : vector<64x128xf32> to vector<64x128xbf16>
    %c0_33 = arith.constant 0 : index
    %c0_34 = arith.constant 0 : index
    %c0_35 = arith.constant 0 : index
    %28 = vector.load %arg3[%c0_33, %c0_34, %c0_35] : memref<1x64x128xbf16, #tpu.memory_space<vmem>>, vector<1x64x128xbf16>
    %29 = vector.shape_cast %28 : vector<1x64x128xbf16> to vector<64x128xbf16>
    %30 = vector.shape_cast %27 : vector<64x128xbf16> to vector<1x64x128xbf16>
    tpu.vector_store %arg3[%c0_33, %c0_34, %c0_35], %30 {strides = array<i32>} : memref<1x64x128xbf16, #tpu.memory_space<vmem>>, vector<1x64x128xbf16>,
    %31 = arith.extf %27 : vector<64x128xbf16> to vector<64x128xf32>
    %cst_36 = arith.constant dense<0.000000e+00> : vector<128xf32>
    %32 = vector.multi_reduction <add>, %31, %cst_36 [0] : vector<64x128xf32> to vector<128xf32>
    %33 = vector.shape_cast %32 : vector<128xf32> to vector<1x128xf32>
    %34 = arith.mulf %31, %31 : vector<64x128xf32>
    %cst_37 = arith.constant dense<0.000000e+00> : vector<128xf32>
    %35 = vector.multi_reduction <add>, %34, %cst_37 [0] : vector<64x128xf32> to vector<128xf32>
    %36 = vector.shape_cast %35 : vector<128xf32> to vector<1x128xf32>
    %37 = tpu.iota {dimensions = array<i32: 0>} : vector<8x128xi32>
    %c0_i32 = arith.constant 0 : i32
    %38 = vector.broadcast %c0_i32 : i32 to vector<8x128xi32>
    %39 = arith.cmpi eq, %37, %38 : vector<8x128xi32>
    %cst_38 = arith.constant 0.000000e+00 : f32
    %40 = vector.shape_cast %33 : vector<1x128xf32> to vector<1x128xf32>
    %41 = vector.broadcast %40 : vector<1x128xf32> to vector<8x128xf32>
    %42 = vector.broadcast %cst_38 : f32 to vector<8x128xf32>
    %43 = arith.select %39, %41, %42 : vector<8x128xi1>, vector<8x128xf32>
    %c1_i32 = arith.constant 1 : i32
    %44 = vector.broadcast %c1_i32 : i32 to vector<8x128xi32>
    %45 = arith.cmpi eq, %37, %44 : vector<8x128xi32>
    %cst_39 = arith.constant 0.000000e+00 : f32
    %46 = vector.shape_cast %36 : vector<1x128xf32> to vector<1x128xf32>
    %47 = vector.broadcast %46 : vector<1x128xf32> to vector<8x128xf32>
    %48 = vector.broadcast %cst_39 : f32 to vector<8x128xf32>
    %49 = arith.select %45, %47, %48 : vector<8x128xi1>, vector<8x128xf32>
    %50 = arith.addf %43, %49 : vector<8x128xf32>
    %c0_40 = arith.constant 0 : index
    %c0_41 = arith.constant 0 : index
    %c0_42 = arith.constant 0 : index
    %51 = vector.load %arg4[%c0_40, %c0_41, %c0_42] : memref<1x8x128xf32, #tpu.memory_space<vmem>>, vector<1x8x128xf32>
    %52 = vector.shape_cast %51 : vector<1x8x128xf32> to vector<8x128xf32>
    %53 = vector.shape_cast %50 : vector<8x128xf32> to vector<1x8x128xf32>
    tpu.vector_store %arg4[%c0_40, %c0_41, %c0_42], %53 {strides = array<i32>} : memref<1x8x128xf32, #tpu.memory_space<vmem>>, vector<1x8x128xf32>,
    return
  }
  func.func @transform_0(%arg0: i32) -> (i32, i32, i32, i32) {
    %c0_i32 = arith.constant 0 : i32
    %c0_i32_0 = arith.constant 0 : i32
    %c0_i32_1 = arith.constant 0 : i32
    %c0_i32_2 = arith.constant 0 : i32
    return %arg0, %c0_i32, %c0_i32_0, %c0_i32_1 : i32, i32, i32, i32
  }
  func.func @transform_1(%arg0: i32) -> (i32, i32, i32, i32) {
    %c0_i32 = arith.constant 0 : i32
    %c0_i32_0 = arith.constant 0 : i32
    %c0_i32_1 = arith.constant 0 : i32
    %c0_i32_2 = arith.constant 0 : i32
    %c0_i32_3 = arith.constant 0 : i32
    return %c0_i32, %c0_i32_0, %c0_i32_1, %c0_i32_2 : i32, i32, i32, i32
  }
  func.func @transform_2(%arg0: i32) -> (i32, i32, i32) {
    %c0_i32 = arith.constant 0 : i32
    %c0_i32_0 = arith.constant 0 : i32
    %c0_i32_1 = arith.constant 0 : i32
    return %arg0, %c0_i32, %c0_i32_0 : i32, i32, i32
  }
  func.func @transform_3(%arg0: i32) -> (i32, i32, i32) {
    %c0_i32 = arith.constant 0 : i32
    %c0_i32_0 = arith.constant 0 : i32
    %c0_i32_1 = arith.constant 0 : i32
    return %arg0, %c0_i32, %c0_i32_0 : i32, i32, i32
  }
}

</mosaic_0001>

<llo_original>
// kernel: tpu_custom_call.1
$region0: #{tpu_custom_call.1}
  #allocation0 [shape = 'u32[]', space=smem, size = 0x4, offset = 0x4, fixed_abs, tag = 'smem constant byte address 0x4 - core index']
  #allocation1 [shape = 'u32[72,128]{1,0:T(1,128)}', space=vmem, size = 0x9000, scoped, tag = 'internal scratch']
  %s0 = inlined_call_operand.vmem [shape: bf16[2,9,9,16], index: 0, kind: input, shape index: {}]
  %s1 = inlined_call_operand.vmem [shape: bf16[2,2,16,128], index: 1, kind: input, shape index: {}]
  %s2 = inlined_call_operand.hbm [shape: bf16[2,64,128], index: 2, kind: output, shape index: {0}]
  %s3 = inlined_call_operand.hbm [shape: f32[2,8,128], index: 3, kind: output, shape index: {1}]
  %4 = xla_tuple %s2, %s3
  %s5 = sld [smem:[#allocation0]]
  $region49: #{tpu_custom_call.1} parent=0
    _
  %s7 = ssub.s32 1, %s5
  %s8 = scalar_select 0, %s7, %s5
  $region1: #{tpu_custom_call.1} parent=0
    #allocation2 [shape = 'u8[32768]{0}', space=vmem, size = 0x8000, scoped, tag = 'output window, operand 0']
    #allocation3 [shape = 's32[2]{0}', space=sflag, size = 0x8, scoped, tag = 'scoped memory for tpu_custom_call.1']
    #allocation4 [shape = 'u8[8192]{0}', space=vmem, size = 0x2000, scoped, tag = 'output window, operand 1']
    #allocation5 [shape = 's32[2]{0}', space=sflag, size = 0x8, scoped, tag = 'scoped memory for tpu_custom_call.1']
    %9 = vsyncpa [#allocation3], 0
    %s10 = scalar_lea.sflag [#allocation3], 1
    %11 = vsyncpa %s10, 0
    %12 = vsyncpa [#allocation5], 0
    %s13 = scalar_lea.sflag [#allocation5], 1
    %14 = vsyncpa %s13, 0
    loop: start=0, step=1, limit=4
    $region2: #{tpu_custom_call.1} parent=1 // loop_pre_header
      _
    $region3: #{tpu_custom_call.1} parent=1 // loop_header
      %s16 = sphi 0, %s20
      %p17 = scmp.ge.s32.totalorder %s16, 4
      %s26 = sphi 0, %s28
      %s29 = sphi 0, %s26
      %s30 = sphi 0, %s29
      %s46 = sphi 0, %s30
      %s50 = sphi 0, %s50
      %s52 = sphi 0, %s50
      %s53 = sphi 0, %s52
      %s67 = sphi 0, %s53
      %s73 = sphi 0, %s75
      %s76 = sphi 0, %s73
      %s77 = sphi 0, %s76
      %s93 = sphi 0, %s77
      %s99 = sphi 0, %s101
      %s102 = sphi 0, %s99
      %s103 = sphi 0, %s102
      %s119 = sphi 0, %s103
    $region4: #{tpu_custom_call.1} parent=1 // loop_header_branch
      %19 = sbr.rel (%p17) target = $region8
    $region5: #{tpu_custom_call.1} parent=1 // loop_body
      %s21 = ssub.s32 %s16, 1
      %s22 = ssub.s32 %s16, 2
      %s23 = sadd.s32 %s16, 1
      %s24 = ssub.s32 %s16, %s23
      %p25 = scmp.eq.s32.totalorder %s24, 0
      %s27 = sadd.s32 %s26, 1
      %s28 = scalar_select %p25, %s26, %s27
      %p31 = pneg %p25
      %p32 = scmp.eq.s32.totalorder %s16, 1
      %p33 = por %p31, %p32
      %p34 = scmp.ne.s32.totalorder %s26, %s29
      %p35 = scmp.eq.s32.totalorder %s16, 0
      %p36 = por %p34, %p35
      %p37 = scmp.ne.s32.totalorder %s26, %s29
      %p38 = scmp.eq.s32.totalorder %s21, 1
      %p39 = por %p37, %p38
      %p40 = scmp.ne.s32.totalorder %s29, %s30
      %p41 = scmp.eq.s32.totalorder %s21, 0
      %p42 = por %p40, %p41
      %p43 = scmp.ne.s32.totalorder %s29, %s30
      %p44 = scmp.eq.s32.totalorder %s22, 1
      %p45 = por %p43, %p44
      %p47 = scmp.ne.s32.totalorder %s30, %s46
      %p48 = scmp.eq.s32.totalorder %s22, 0
      %p49 = por %p47, %p48
      %s51 = sadd.s32 %s50, 1
      %p54 = scmp.eq.s32.totalorder %s16, 1
      %p55 = scmp.ne.s32.totalorder %s50, %s52
      %p56 = scmp.eq.s32.totalorder %s16, 0
      %p57 = por %p55, %p56
      %p58 = scmp.ne.s32.totalorder %s50, %s52
      %p59 = scmp.eq.s32.totalorder %s21, 1
      %p60 = por %p58, %p59
      %p61 = scmp.ne.s32.totalorder %s52, %s53
      %p62 = scmp.eq.s32.totalorder %s21, 0
      %p63 = por %p61, %p62
      %p64 = scmp.ne.s32.totalorder %s52, %s53
      %p65 = scmp.eq.s32.totalorder %s22, 1
      %p66 = por %p64, %p65
      %p68 = scmp.ne.s32.totalorder %s53, %s67
      %p69 = scmp.eq.s32.totalorder %s22, 0
      %p70 = por %p68, %p69
      %s71 = ssub.s32 %s16, %s23
      %p72 = scmp.eq.s32.totalorder %s71, 0
      %s74 = sadd.s32 %s73, 1
      %s75 = scalar_select %p72, %s73, %s74
      %p78 = pneg %p72
      %p79 = scmp.eq.s32.totalorder %s16, 1
      %p80 = por %p78, %p79
      %p81 = scmp.ne.s32.totalorder %s73, %s76
      %p82 = scmp.eq.s32.totalorder %s16, 0
      %p83 = por %p81, %p82
      %p84 = scmp.ne.s32.totalorder %s73, %s76
      %p85 = scmp.eq.s32.totalorder %s21, 1
      %p86 = por %p84, %p85
      %p87 = scmp.ne.s32.totalorder %s76, %s77
      %p88 = scmp.eq.s32.totalorder %s21, 0
      %p89 = por %p87, %p88
      %p90 = scmp.ne.s32.totalorder %s76, %s77
      %p91 = scmp.eq.s32.totalorder %s22, 1
      %p92 = por %p90, %p91
      %p94 = scmp.ne.s32.totalorder %s77, %s93
      %p95 = scmp.eq.s32.totalorder %s22, 0
      %p96 = por %p94, %p95
      %s97 = ssub.s32 %s16, %s23
      %p98 = scmp.eq.s32.totalorder %s97, 0
      %s100 = sadd.s32 %s99, 1
      %s101 = scalar_select %p98, %s99, %s100
      %p104 = pneg %p98
      %p105 = scmp.eq.s32.totalorder %s16, 1
      %p106 = por %p104, %p105
      %p107 = scmp.ne.s32.totalorder %s99, %s102
      %p108 = scmp.eq.s32.totalorder %s16, 0
      %p109 = por %p107, %p108
      %p110 = scmp.ne.s32.totalorder %s99, %s102
      %p111 = scmp.eq.s32.totalorder %s21, 1
      %p112 = por %p110, %p111
      %p113 = scmp.ne.s32.totalorder %s102, %s103
      %p114 = scmp.eq.s32.totalorder %s21, 0
      %p115 = por %p113, %p114
      %p116 = scmp.ne.s32.totalorder %s102, %s103
      %p117 = scmp.eq.s32.totalorder %s22, 1
      %p118 = por %p116, %p117
      %p120 = scmp.ne.s32.totalorder %s103, %s119
      %p121 = scmp.eq.s32.totalorder %s22, 0
      %p122 = por %p120, %p121
      %p123 = scmp.le.s32.totalorder 1, %s16
      %p124 = scmp.lt.s32.totalorder %s16, 3
      %p125 = pnand %p123, %p124
      %p126 = pneg %p125
      // Predicated region
      $region9: #{tpu_custom_call.1} parent=5 // pred_check
        _
      $region10: #{tpu_custom_call.1} parent=5 // pred_check_branch
        %128 = sbr.rel (%p125) target = $region12
      $region11: #{tpu_custom_call.1} parent=5 // pred_region
        %s129 = ssub.s32 %s16, 1
        // Predicated region
        $region13: #{tpu_custom_call.1} parent=11 // pred_check
          %p130 = pneg %p63
        $region14: #{tpu_custom_call.1} parent=11 // pred_check_branch
          %132 = sbr.rel (%p130) target = $region16
        $region15: #{tpu_custom_call.1} parent=11 // pred_region
          _
        $region16: #{tpu_custom_call.1} parent=11 // pred_fallthru
          _
      $region12: #{tpu_custom_call.1} parent=5 // pred_fallthru
        _
      %p133 = scmp.lt.s32.totalorder %s16, 2
      // Predicated region
      $region17: #{tpu_custom_call.1} parent=5 // pred_check
        %p134 = pneg %p133
      $region18: #{tpu_custom_call.1} parent=5 // pred_check_branch
        %136 = sbr.rel (%p134) target = $region20
      $region19: #{tpu_custom_call.1} parent=5 // pred_region
        // Predicated region
        $region21: #{tpu_custom_call.1} parent=19 // pred_check
          %p137 = pneg %p36
        $region22: #{tpu_custom_call.1} parent=19 // pred_check_branch
          %139 = sbr.rel (%p137) target = $region24
        $region23: #{tpu_custom_call.1} parent=19 // pred_region
          %p140 = scmp.lt.s32.totalorder %s16, 1
          %s141 = scalar_select %p140, %s16, 1
          %s142 = smul.addr %s141, 18
          %s143 = smul.addr %s142, 4
          %s144 = scalar_lea.vmem %s0, %s143
        $region24: #{tpu_custom_call.1} parent=19 // pred_fallthru
          _
      $region20: #{tpu_custom_call.1} parent=5 // pred_fallthru
        _
      %p145 = scmp.le.s32.totalorder 1, %s16
      %p146 = scmp.lt.s32.totalorder %s16, 3
      %p147 = pnand %p145, %p146
      %p148 = pneg %p147
      // Predicated region
      $region25: #{tpu_custom_call.1} parent=5 // pred_check
        _
      $region26: #{tpu_custom_call.1} parent=5 // pred_check_branch
        %150 = sbr.rel (%p147) target = $region28
      $region27: #{tpu_custom_call.1} parent=5 // pred_region
        %s151 = ssub.s32 %s16, 1
        %p152 = scmp.lt.s32.totalorder %s21, 1
        %s153 = scalar_select %p152, %s21, 1
        %s154 = smul.addr %s153, 18
        %s155 = smul.addr %s154, 4
        %s156 = scalar_lea.vmem %s0, %s155
        %p157 = pneg %p42
        %p158 = pneg %p39
        %p159 = pneg %p63
        %p160 = pneg %p60
        %p161 = pneg %p89
        %p162 = pneg %p86
        %s163 = sand.u32 %s76, 1
        %s164 = scalar_lea.sflag [#allocation3], %s163
        %s165 = sand.u32 %s76, 1
        %s166 = smul.addr %s165, 32
        %s167 = scalar_lea.vmem [#allocation2], %s166
        %p168 = pneg %p115
        %p169 = pneg %p112
        %s170 = sand.u32 %s102, 1
        %s171 = scalar_lea.sflag [#allocation5], %s170
        %s172 = sand.u32 %s102, 1
        %s173 = smul.addr %s172, 8
        %s174 = scalar_lea.vmem [#allocation4], %s173
        %p175 = scmp.lt.s32.totalorder %s21, 1
        %s176 = scalar_select %p175, %s21, 1
        %s177 = smul.addr %s176, 18
        %s178 = smul.addr %s177, 4
        %s179 = scalar_lea.vmem %s0, %s178
        %v181 = vld [vmem:[%s179] sm:$0xf]
        %v182 = vld [vmem:[%s179 + $0x8] sm:$0xf]
        %v183 = vld [vmem:[%s179 + $0x10] sm:$0xf]
        %v184 = vld [vmem:[%s179 + $0x18] sm:$0xf]
        %v185 = vld [vmem:[%s179 + $0x20] sm:$0xf]
        %v186 = vld [vmem:[%s179 + $0x28] sm:$0xf]
        %v187 = vld [vmem:[%s179 + $0x30] sm:$0xf]
        %v188 = vld [vmem:[%s179 + $0x38] sm:$0xf]
        %v189 = vld [vmem:[%s1] sm:$0xf]
        %v190 = vld [vmem:[%s1 + $0x4] sm:$0xf]
        %v191 = vld [vmem:[%s179 + $0x4] sm:$0x1]
        %v192 = vld [vmem:[%s179 + $0xc] sm:$0x1]
        %v193 = vld [vmem:[%s179 + $0x14] sm:$0x1]
        %v194 = vld [vmem:[%s179 + $0x1c] sm:$0x1]
        %v195 = vld [vmem:[%s179 + $0x24] sm:$0x1]
        %v196 = vld [vmem:[%s179 + $0x2c] sm:$0x1]
        %v197 = vld [vmem:[%s179 + $0x34] sm:$0x1]
        %v198 = vld [vmem:[%s179 + $0x3c] sm:$0x1]
        %vm199 = vsmask.f32 3328
        %vm200 = vsmask.f32 7440
        %vm201 = vmor %vm199, %vm200
        %v203 = vshrl.u32 %v181, 16
        %v205 = vrot.slane %v203, 4
        %v206 = vshll.u32 %v181, 16
        %v208 = vrot.slane %v206, 5
        %v209 = vor.u32 %v205, %v208
        %v210 = vrot.slane %v209, 4
        %v212 = vshll.u32 %v191, 16
        %v214 = vrot.slane %v212, 5
        %v215 = vsel %vm201, %v210, %v214
        %v217 = vshrl.u32 %v182, 16
        %v219 = vrot.slane %v217, 4
        %v220 = vshll.u32 %v182, 16
        %v222 = vrot.slane %v220, 5
        %v223 = vor.u32 %v219, %v222
        %v224 = vrot.slane %v223, 4
        %v226 = vshll.u32 %v192, 16
        %v228 = vrot.slane %v226, 5
        %v229 = vsel %vm201, %v224, %v228
        %v231 = vshrl.u32 %v183, 16
        %v233 = vrot.slane %v231, 4
        %v234 = vshll.u32 %v183, 16
        %v236 = vrot.slane %v234, 5
        %v237 = vor.u32 %v233, %v236
        %v238 = vrot.slane %v237, 4
        %v240 = vshll.u32 %v193, 16
        %v242 = vrot.slane %v240, 5
        %v243 = vsel %vm201, %v238, %v242
        %v245 = vshrl.u32 %v184, 16
        %v247 = vrot.slane %v245, 4
        %v248 = vshll.u32 %v184, 16
        %v250 = vrot.slane %v248, 5
        %v251 = vor.u32 %v247, %v250
        %v252 = vrot.slane %v251, 4
        %v254 = vshll.u32 %v194, 16
        %v256 = vrot.slane %v254, 5
        %v257 = vsel %vm201, %v252, %v256
        %v259 = vshrl.u32 %v185, 16
        %v261 = vrot.slane %v259, 4
        %v262 = vshll.u32 %v185, 16
        %v264 = vrot.slane %v262, 5
        %v265 = vor.u32 %v261, %v264
        %v266 = vrot.slane %v265, 4
        %v268 = vshll.u32 %v195, 16
        %v270 = vrot.slane %v268, 5
        %v271 = vsel %vm201, %v266, %v270
        %v273 = vshrl.u32 %v186, 16
        %v275 = vrot.slane %v273, 4
        %v276 = vshll.u32 %v186, 16
        %v278 = vrot.slane %v276, 5
        %v279 = vor.u32 %v275, %v278
        %v280 = vrot.slane %v279, 4
        %v282 = vshll.u32 %v196, 16
        %v284 = vrot.slane %v282, 5
        %v285 = vsel %vm201, %v280, %v284
        %v287 = vshrl.u32 %v187, 16
        %v289 = vrot.slane %v287, 4
        %v290 = vshll.u32 %v187, 16
        %v292 = vrot.slane %v290, 5
        %v293 = vor.u32 %v289, %v292
        %v294 = vrot.slane %v293, 4
        %v296 = vshll.u32 %v197, 16
        %v298 = vrot.slane %v296, 5
        %v299 = vsel %vm201, %v294, %v298
        %v301 = vshrl.u32 %v188, 16
        %v303 = vrot.slane %v301, 4
        %v304 = vshll.u32 %v188, 16
        %v306 = vrot.slane %v304, 5
        %v307 = vor.u32 %v303, %v306
        %v308 = vrot.slane %v307, 4
        %v310 = vshll.u32 %v198, 16
        %v312 = vrot.slane %v310, 5
        %v313 = vsel %vm201, %v308, %v312
        %s314 = scalar_lea.vmem %s1, 8
        %v315 = vld [vmem:[%s314] sm:$0xf]
        %v316 = vld [vmem:[%s314 + $0x4] sm:$0xf]
        %v317 = vunpack.c.l.b16 %v215
        %v318 = vunpack.c.l.b16 %v229
        %v319 = vunpack.c.l.b16 %v243
        %v320 = vunpack.c.l.b16 %v257
        %v321 = vunpack.c.l.b16 %v271
        %v322 = vunpack.c.l.b16 %v285
        %v323 = vunpack.c.l.b16 %v299
        %v324 = vunpack.c.l.b16 %v313
        %v325 = vpack.c.b16 %v318, %v317
        %v326 = vpack.c.b16 %v320, %v319
        %v327 = vpack.c.b16 %v322, %v321
        %v328 = vpack.c.b16 %v324, %v323
        %v331 = vunpack.c.l.b16 %v315
        %v332 = vunpack.c.l.b16 %v316
        %v333 = vpack.c.b16 %v332, %v331
        %vm335 = vcmask 130048
        %v337 = vsel %vm335, %v325, 0
        %v340 = vsel %vm335, %v326, 0
        %v343 = vsel %vm335, %v327, 0
        %v346 = vsel %vm335, %v328, 0
        %348 = vmatpush.bf16.msra.mxu0 0
        %349 = vmatpush.bf16.msra.mxu0 0
        %350 = vmatpush.bf16.msra.mxu0 0
        %351 = vmatpush.bf16.msra.mxu0 0
        %352 = vmatpush.bf16.msra.mxu0 0
        %353 = vmatpush.bf16.msra.mxu0 0
        %354 = vmatpush.bf16.msra.mxu0 0
        %355 = vmatpush.bf16.msra.mxu0 %v333
        %356 = vmatmul.bf16.gmra.mxu0 %v337
        %v357 = vpop.f32.mrf.mxu0
        %v358 = vadd.f32 0.0, %v357
        %v359 = vpop.f32.mrf.mxu0
        %v360 = vadd.f32 0.0, %v359
        %361 = vmatmul.bf16.gmra.mxu0 %v340
        %v362 = vpop.f32.mrf.mxu0
        %v363 = vadd.f32 0.0, %v362
        %v364 = vpop.f32.mrf.mxu0
        %v365 = vadd.f32 0.0, %v364
        %366 = vmatmul.bf16.gmra.mxu0 %v343
        %v367 = vpop.f32.mrf.mxu0
        %v368 = vadd.f32 0.0, %v367
        %v369 = vpop.f32.mrf.mxu0
        %v370 = vadd.f32 0.0, %v369
        %371 = vmatmul.bf16.gmra.mxu0 %v346
        %v372 = vpop.f32.mrf.mxu0
        %v373 = vadd.f32 0.0, %v372
        %v374 = vpop.f32.mrf.mxu0
        %v375 = vadd.f32 0.0, %v374
        %376 = vdwg.mxu0
        %v385 = vunpack.c.l.b16 %v181
        %v386 = vunpack.c.l.b16 %v182
        %v387 = vunpack.c.l.b16 %v183
        %v388 = vunpack.c.l.b16 %v184
        %v389 = vunpack.c.l.b16 %v185
        %v390 = vunpack.c.l.b16 %v186
        %v391 = vunpack.c.l.b16 %v187
        %v392 = vunpack.c.l.b16 %v188
        %v393 = vpack.c.b16 %v386, %v385
        %v394 = vpack.c.b16 %v388, %v387
        %v395 = vpack.c.b16 %v390, %v389
        %v396 = vpack.c.b16 %v392, %v391
        %v399 = vunpack.c.l.b16 %v189
        %v400 = vunpack.c.l.b16 %v190
        %v401 = vpack.c.b16 %v400, %v399
        %v404 = vsel %vm335, %v393, 0
        %v407 = vsel %vm335, %v394, 0
        %v410 = vsel %vm335, %v395, 0
        %v413 = vsel %vm335, %v396, 0
        %415 = vmatpush.bf16.msra.mxu0 0
        %416 = vmatpush.bf16.msra.mxu0 0
        %417 = vmatpush.bf16.msra.mxu0 0
        %418 = vmatpush.bf16.msra.mxu0 0
        %419 = vmatpush.bf16.msra.mxu0 0
        %420 = vmatpush.bf16.msra.mxu0 0
        %421 = vmatpush.bf16.msra.mxu0 0
        %422 = vmatpush.bf16.msra.mxu0 %v401
        %423 = vmatmul.bf16.gmra.mxu0 %v404
        %v424 = vpop.f32.mrf.mxu0
        %v425 = vadd.f32 %v358, %v424
        %v426 = vpop.f32.mrf.mxu0
        %v427 = vadd.f32 %v360, %v426
        %428 = vmatmul.bf16.gmra.mxu0 %v407
        %v429 = vpop.f32.mrf.mxu0
        %v430 = vadd.f32 %v363, %v429
        %v431 = vpop.f32.mrf.mxu0
        %v432 = vadd.f32 %v365, %v431
        %433 = vmatmul.bf16.gmra.mxu0 %v410
        %v434 = vpop.f32.mrf.mxu0
        %v435 = vadd.f32 %v368, %v434
        %v436 = vpop.f32.mrf.mxu0
        %v437 = vadd.f32 %v370, %v436
        %438 = vmatmul.bf16.gmra.mxu0 %v413
        %v439 = vpop.f32.mrf.mxu0
        %v440 = vadd.f32 %v373, %v439
        %v441 = vpop.f32.mrf.mxu0
        %v442 = vadd.f32 %v375, %v441
        %443 = vdwg.mxu0
        %s444 = scalar_lea.vmem %s179, 8
        %v445 = vld [vmem:[%s444] sm:$0xf]
        %v446 = vld [vmem:[%s444 + $0x8] sm:$0xf]
        %v447 = vld [vmem:[%s444 + $0x10] sm:$0xf]
        %v448 = vld [vmem:[%s444 + $0x18] sm:$0xf]
        %v449 = vld [vmem:[%s444 + $0x20] sm:$0xf]
        %v450 = vld [vmem:[%s444 + $0x28] sm:$0xf]
        %v451 = vld [vmem:[%s444 + $0x30] sm:$0xf]
        %v452 = vld [vmem:[%s444 + $0x38] sm:$0xf]
        %s453 = scalar_lea.vmem %s1, 16
        %v454 = vld [vmem:[%s453] sm:$0xf]
        %v455 = vld [vmem:[%s453 + $0x4] sm:$0xf]
        %v464 = vunpack.c.l.b16 %v445
        %v465 = vunpack.c.l.b16 %v446
        %v466 = vunpack.c.l.b16 %v447
        %v467 = vunpack.c.l.b16 %v448
        %v468 = vunpack.c.l.b16 %v449
        %v469 = vunpack.c.l.b16 %v450
        %v470 = vunpack.c.l.b16 %v451
        %v471 = vunpack.c.l.b16 %v452
        %v472 = vpack.c.b16 %v465, %v464
        %v473 = vpack.c.b16 %v467, %v466
        %v474 = vpack.c.b16 %v469, %v468
        %v475 = vpack.c.b16 %v471, %v470
        %v478 = vunpack.c.l.b16 %v454
        %v479 = vunpack.c.l.b16 %v455
        %v480 = vpack.c.b16 %v479, %v478
        %v483 = vsel %vm335, %v472, 0
        %v486 = vsel %vm335, %v473, 0
        %v489 = vsel %vm335, %v474, 0
        %v492 = vsel %vm335, %v475, 0
        %494 = vmatpush.bf16.msra.mxu0 0
        %495 = vmatpush.bf16.msra.mxu0 0
        %496 = vmatpush.bf16.msra.mxu0 0
        %497 = vmatpush.bf16.msra.mxu0 0
        %498 = vmatpush.bf16.msra.mxu0 0
        %499 = vmatpush.bf16.msra.mxu0 0
        %500 = vmatpush.bf16.msra.mxu0 0
        %501 = vmatpush.bf16.msra.mxu0 %v480
        %502 = vmatmul.bf16.gmra.mxu0 %v483
        %v503 = vpop.f32.mrf.mxu0
        %v504 = vadd.f32 0.0, %v503
        %v505 = vpop.f32.mrf.mxu0
        %v506 = vadd.f32 0.0, %v505
        %507 = vmatmul.bf16.gmra.mxu0 %v486
        %v508 = vpop.f32.mrf.mxu0
        %v509 = vadd.f32 0.0, %v508
        %v510 = vpop.f32.mrf.mxu0
        %v511 = vadd.f32 0.0, %v510
        %512 = vmatmul.bf16.gmra.mxu0 %v489
        %v513 = vpop.f32.mrf.mxu0
        %v514 = vadd.f32 0.0, %v513
        %v515 = vpop.f32.mrf.mxu0
        %v516 = vadd.f32 0.0, %v515
        %517 = vmatmul.bf16.gmra.mxu0 %v492
        %v518 = vpop.f32.mrf.mxu0
        %v519 = vadd.f32 0.0, %v518
        %v520 = vpop.f32.mrf.mxu0
        %v521 = vadd.f32 0.0, %v520
        %522 = vdwg.mxu0
        %v523 = vadd.f32 %v425, %v504
        %v524 = vadd.f32 %v427, %v506
        %v525 = vadd.f32 %v430, %v509
        %v526 = vadd.f32 %v432, %v511
        %v527 = vadd.f32 %v435, %v514
        %v528 = vadd.f32 %v437, %v516
        %v529 = vadd.f32 %v440, %v519
        %v530 = vadd.f32 %v442, %v521
        %v531 = vld [vmem:[%s444] sm:$0xf]
        %v532 = vld [vmem:[%s444 + $0x4] sm:$0x1]
        %v533 = vld [vmem:[%s444 + $0x8] sm:$0xf]
        %v534 = vld [vmem:[%s444 + $0xc] sm:$0x1]
        %v535 = vld [vmem:[%s444 + $0x10] sm:$0xf]
        %v536 = vld [vmem:[%s444 + $0x14] sm:$0x1]
        %v537 = vld [vmem:[%s444 + $0x18] sm:$0xf]
        %v538 = vld [vmem:[%s444 + $0x1c] sm:$0x1]
        %v539 = vld [vmem:[%s444 + $0x20] sm:$0xf]
        %v540 = vld [vmem:[%s444 + $0x24] sm:$0x1]
        %v541 = vld [vmem:[%s444 + $0x28] sm:$0xf]
        %v542 = vld [vmem:[%s444 + $0x2c] sm:$0x1]
        %v543 = vld [vmem:[%s444 + $0x30] sm:$0xf]
        %v544 = vld [vmem:[%s444 + $0x34] sm:$0x1]
        %v545 = vld [vmem:[%s444 + $0x38] sm:$0xf]
        %v546 = vld [vmem:[%s444 + $0x3c] sm:$0x1]
        %v548 = vshrl.u32 %v531, 16
        %v550 = vrot.slane %v548, 4
        %v551 = vshll.u32 %v531, 16
        %v553 = vrot.slane %v551, 5
        %v554 = vor.u32 %v550, %v553
        %v555 = vrot.slane %v554, 4
        %v557 = vshll.u32 %v532, 16
        %v559 = vrot.slane %v557, 5
        %v560 = vsel %vm201, %v555, %v559
        %v562 = vshrl.u32 %v533, 16
        %v564 = vrot.slane %v562, 4
        %v565 = vshll.u32 %v533, 16
        %v567 = vrot.slane %v565, 5
        %v568 = vor.u32 %v564, %v567
        %v569 = vrot.slane %v568, 4
        %v571 = vshll.u32 %v534, 16
        %v573 = vrot.slane %v571, 5
        %v574 = vsel %vm201, %v569, %v573
        %v576 = vshrl.u32 %v535, 16
        %v578 = vrot.slane %v576, 4
        %v579 = vshll.u32 %v535, 16
        %v581 = vrot.slane %v579, 5
        %v582 = vor.u32 %v578, %v581
        %v583 = vrot.slane %v582, 4
        %v585 = vshll.u32 %v536, 16
        %v587 = vrot.slane %v585, 5
        %v588 = vsel %vm201, %v583, %v587
        %v590 = vshrl.u32 %v537, 16
        %v592 = vrot.slane %v590, 4
        %v593 = vshll.u32 %v537, 16
        %v595 = vrot.slane %v593, 5
        %v596 = vor.u32 %v592, %v595
        %v597 = vrot.slane %v596, 4
        %v599 = vshll.u32 %v538, 16
        %v601 = vrot.slane %v599, 5
        %v602 = vsel %vm201, %v597, %v601
        %v604 = vshrl.u32 %v539, 16
        %v606 = vrot.slane %v604, 4
        %v607 = vshll.u32 %v539, 16
        %v609 = vrot.slane %v607, 5
        %v610 = vor.u32 %v606, %v609
        %v611 = vrot.slane %v610, 4
        %v613 = vshll.u32 %v540, 16
        %v615 = vrot.slane %v613, 5
        %v616 = vsel %vm201, %v611, %v615
        %v618 = vshrl.u32 %v541, 16
        %v620 = vrot.slane %v618, 4
        %v621 = vshll.u32 %v541, 16
        %v623 = vrot.slane %v621, 5
        %v624 = vor.u32 %v620, %v623
        %v625 = vrot.slane %v624, 4
        %v627 = vshll.u32 %v542, 16
        %v629 = vrot.slane %v627, 5
        %v630 = vsel %vm201, %v625, %v629
        %v632 = vshrl.u32 %v543, 16
        %v634 = vrot.slane %v632, 4
        %v635 = vshll.u32 %v543, 16
        %v637 = vrot.slane %v635, 5
        %v638 = vor.u32 %v634, %v637
        %v639 = vrot.slane %v638, 4
        %v641 = vshll.u32 %v544, 16
        %v643 = vrot.slane %v641, 5
        %v644 = vsel %vm201, %v639, %v643
        %v646 = vshrl.u32 %v545, 16
        %v648 = vrot.slane %v646, 4
        %v649 = vshll.u32 %v545, 16
        %v651 = vrot.slane %v649, 5
        %v652 = vor.u32 %v648, %v651
        %v653 = vrot.slane %v652, 4
        %v655 = vshll.u32 %v546, 16
        %v657 = vrot.slane %v655, 5
        %v658 = vsel %vm201, %v653, %v657
        %s659 = scalar_lea.vmem %s1, 24
        %v660 = vld [vmem:[%s659] sm:$0xf]
        %v661 = vld [vmem:[%s659 + $0x4] sm:$0xf]
        %v662 = vunpack.c.l.b16 %v560
        %v663 = vunpack.c.l.b16 %v574
        %v664 = vunpack.c.l.b16 %v588
        %v665 = vunpack.c.l.b16 %v602
        %v666 = vunpack.c.l.b16 %v616
        %v667 = vunpack.c.l.b16 %v630
        %v668 = vunpack.c.l.b16 %v644
        %v669 = vunpack.c.l.b16 %v658
        %v670 = vpack.c.b16 %v663, %v662
        %v671 = vpack.c.b16 %v665, %v664
        %v672 = vpack.c.b16 %v667, %v666
        %v673 = vpack.c.b16 %v669, %v668
        %v676 = vunpack.c.l.b16 %v660
        %v677 = vunpack.c.l.b16 %v661
        %v678 = vpack.c.b16 %v677, %v676
        %v681 = vsel %vm335, %v670, 0
        %v684 = vsel %vm335, %v671, 0
        %v687 = vsel %vm335, %v672, 0
        %v690 = vsel %vm335, %v673, 0
        %692 = vmatpush.bf16.msra.mxu0 0
        %693 = vmatpush.bf16.msra.mxu0 0
        %694 = vmatpush.bf16.msra.mxu0 0
        %695 = vmatpush.bf16.msra.mxu0 0
        %696 = vmatpush.bf16.msra.mxu0 0
        %697 = vmatpush.bf16.msra.mxu0 0
        %698 = vmatpush.bf16.msra.mxu0 0
        %699 = vmatpush.bf16.msra.mxu0 %v678
        %700 = vmatmul.bf16.gmra.mxu0 %v681
        %v701 = vpop.f32.mrf.mxu0
        %v702 = vadd.f32 0.0, %v701
        %v703 = vpop.f32.mrf.mxu0
        %v704 = vadd.f32 0.0, %v703
        %705 = vmatmul.bf16.gmra.mxu0 %v684
        %v706 = vpop.f32.mrf.mxu0
        %v707 = vadd.f32 0.0, %v706
        %v708 = vpop.f32.mrf.mxu0
        %v709 = vadd.f32 0.0, %v708
        %710 = vmatmul.bf16.gmra.mxu0 %v687
        %v711 = vpop.f32.mrf.mxu0
        %v712 = vadd.f32 0.0, %v711
        %v713 = vpop.f32.mrf.mxu0
        %v714 = vadd.f32 0.0, %v713
        %715 = vmatmul.bf16.gmra.mxu0 %v690
        %v716 = vpop.f32.mrf.mxu0
        %v717 = vadd.f32 0.0, %v716
        %v718 = vpop.f32.mrf.mxu0
        %v719 = vadd.f32 0.0, %v718
        %720 = vdwg.mxu0
        %v721 = vadd.f32 %v523, %v702
        %v722 = vadd.f32 %v524, %v704
        %v723 = vadd.f32 %v525, %v707
        %v724 = vadd.f32 %v526, %v709
        %v725 = vadd.f32 %v527, %v712
        %v726 = vadd.f32 %v528, %v714
        %v727 = vadd.f32 %v529, %v717
        %v728 = vadd.f32 %v530, %v719
        %v729 = vpack.c.bf16 %v721, %v721
        %v730 = vpack.c.bf16 %v722, %v722
        %v731 = vpack.c.bf16 %v723, %v723
        %v732 = vpack.c.bf16 %v724, %v724
        %v733 = vpack.c.bf16 %v725, %v725
        %v734 = vpack.c.bf16 %v726, %v726
        %v735 = vpack.c.bf16 %v727, %v727
        %v736 = vpack.c.bf16 %v728, %v728
        %737 = vst [vmem:[%s167] sm:$0xf] %v729
        %738 = vst [vmem:[%s167 + $0x4] sm:$0xf] %v730
        %739 = vst [vmem:[%s167 + $0x8] sm:$0xf] %v731
        %740 = vst [vmem:[%s167 + $0xc] sm:$0xf] %v732
        %741 = vst [vmem:[%s167 + $0x10] sm:$0xf] %v733
        %742 = vst [vmem:[%s167 + $0x14] sm:$0xf] %v734
        %743 = vst [vmem:[%s167 + $0x18] sm:$0xf] %v735
        %744 = vst [vmem:[%s167 + $0x1c] sm:$0xf] %v736
        %v745 = vunpack.c.l.bf16 %v729
        %v746 = vunpack.c.l.bf16 %v730
        %v747 = vunpack.c.l.bf16 %v731
        %v748 = vunpack.c.l.bf16 %v732
        %v749 = vunpack.c.l.bf16 %v733
        %v750 = vunpack.c.l.bf16 %v734
        %v751 = vunpack.c.l.bf16 %v735
        %v752 = vunpack.c.l.bf16 %v736
        %v753 = vadd.f32 %v745, %v746
        %v754 = vadd.f32 %v753, %v747
        %v755 = vadd.f32 %v754, %v748
        %v756 = vadd.f32 %v755, %v749
        %v757 = vadd.f32 %v756, %v750
        %v758 = vadd.f32 %v757, %v751
        %v759 = vadd.f32 %v758, %v752
        %v760 = vrot.slane %v759, 4
        %v761 = vadd.f32 %v759, %v760
        %v762 = vrot.slane %v761, 2
        %v763 = vadd.f32 %v761, %v762
        %v764 = vrot.slane %v763, 1
        %v765 = vadd.f32 %v763, %v764
        %v766 = vmul.f32 %v745, %v745
        %v767 = vmul.f32 %v746, %v746
        %v768 = vmul.f32 %v747, %v747
        %v769 = vmul.f32 %v748, %v748
        %v770 = vmul.f32 %v749, %v749
        %v771 = vmul.f32 %v750, %v750
        %v772 = vmul.f32 %v751, %v751
        %v773 = vmul.f32 %v752, %v752
        %v774 = vadd.f32 %v766, %v767
        %v775 = vadd.f32 %v774, %v768
        %v776 = vadd.f32 %v775, %v769
        %v777 = vadd.f32 %v776, %v770
        %v778 = vadd.f32 %v777, %v771
        %v779 = vadd.f32 %v778, %v772
        %v780 = vadd.f32 %v779, %v773
        %v781 = vrot.slane %v780, 4
        %v782 = vadd.f32 %v780, %v781
        %v783 = vrot.slane %v782, 2
        %v784 = vadd.f32 %v782, %v783
        %v785 = vrot.slane %v784, 1
        %v786 = vadd.f32 %v784, %v785
        %v787 = vlaneseq
        %v788 = vshrl.u32 %v787, 7
        %vm789 = vcmp.eq.s32.totalorder %v788, 0
        %v790 = vsel %vm789, %v765, 0.0
        %vm791 = vcmp.eq.s32.totalorder %v788, 1
        %v792 = vsel %vm791, %v786, 0.0
        %v793 = vadd.f32 %v790, %v792
        %794 = vst [vmem:[%s174] sm:$0xff] %v793
        %s795 = sand.u32 %s76, 1
        %s796 = scalar_lea.sflag [#allocation3], %s795
        %s797 = sand.u32 %s76, 1
        %s798 = smul.addr %s797, 32
        %s799 = scalar_lea.vmem [#allocation2], %s798
        %s800 = sand.u32 %s102, 1
        %s801 = scalar_lea.sflag [#allocation5], %s800
        %s802 = sand.u32 %s102, 1
        %s803 = smul.addr %s802, 8
        %s804 = scalar_lea.vmem [#allocation4], %s803
        // Predicated region
        $region29: #{tpu_custom_call.1} parent=27 // pred_check
          %p805 = pneg %p86
        $region30: #{tpu_custom_call.1} parent=27 // pred_check_branch
          %807 = sbr.rel (%p805) target = $region32
        $region31: #{tpu_custom_call.1} parent=27 // pred_region
          %809 = vsyncadd %s796, 0
          %s810 = smul.addr %s21, 8
          %s811 = smul.addr %s810, 4
          %s812 = scalar_lea.hbm %s2, %s811
          %s813 = sshll.u32 %s799, 4
          %s814 = int_to_ptr.vmem [resolvable:$true] %s813
          %s815 = sshll.u32 %s812, 4
          %s816 = int_to_ptr.hbm [resolvable:$true] %s815
          %821 = dma.vmem_to_hbm [thread:$0]  %s814, 512, %s816, %s796, 64, 64, 4
        $region32: #{tpu_custom_call.1} parent=27 // pred_fallthru
          _
        // Predicated region
        $region33: #{tpu_custom_call.1} parent=27 // pred_check
          %p822 = pneg %p112
        $region34: #{tpu_custom_call.1} parent=27 // pred_check_branch
          %824 = sbr.rel (%p822) target = $region36
        $region35: #{tpu_custom_call.1} parent=27 // pred_region
          %826 = vsyncadd %s801, 0
          %s827 = smul.addr %s21, 8
          %s828 = scalar_lea.hbm %s3, %s827
          %s830 = sshll.u32 %s804, 4
          %s831 = int_to_ptr.vmem [resolvable:$true] %s830
          %s832 = sshll.u32 %s828, 4
          %s833 = int_to_ptr.hbm [resolvable:$true] %s832
          %835 = dma.vmem_to_hbm [thread:$0]  %s831, 128, %s833, %s801
        $region36: #{tpu_custom_call.1} parent=27 // pred_fallthru
          _
      $region28: #{tpu_custom_call.1} parent=5 // pred_fallthru
        _
      %p836 = scmp.le.s32.totalorder 2, %s16
      // Predicated region
      $region37: #{tpu_custom_call.1} parent=5 // pred_check
        %p837 = pneg %p836
      $region38: #{tpu_custom_call.1} parent=5 // pred_check_branch
        %839 = sbr.rel (%p837) target = $region40
      $region39: #{tpu_custom_call.1} parent=5 // pred_region
        %s840 = ssub.s32 %s16, 2
        // Predicated region
        $region41: #{tpu_custom_call.1} parent=39 // pred_check
          %p841 = pneg %p92
        $region42: #{tpu_custom_call.1} parent=39 // pred_check_branch
          %843 = sbr.rel (%p841) target = $region44
        $region43: #{tpu_custom_call.1} parent=39 // pred_region
          %s844 = sand.u32 %s77, 1
          %s845 = scalar_lea.sflag [#allocation3], %s844
          %s846 = sand.u32 %s77, 1
          %s847 = smul.addr %s846, 32
          %s848 = scalar_lea.vmem [#allocation2], %s847
          %850 = dma.done %s845, 512
        $region44: #{tpu_custom_call.1} parent=39 // pred_fallthru
          _
        // Predicated region
        $region45: #{tpu_custom_call.1} parent=39 // pred_check
          %p851 = pneg %p118
        $region46: #{tpu_custom_call.1} parent=39 // pred_check_branch
          %853 = sbr.rel (%p851) target = $region48
        $region47: #{tpu_custom_call.1} parent=39 // pred_region
          %s854 = sand.u32 %s103, 1
          %s855 = scalar_lea.sflag [#allocation5], %s854
          %s856 = sand.u32 %s103, 1
          %s857 = smul.addr %s856, 8
          %s858 = scalar_lea.vmem [#allocation4], %s857
          %860 = dma.done %s855, 128
        $region48: #{tpu_custom_call.1} parent=39 // pred_fallthru
          _
      $region40: #{tpu_custom_call.1} parent=5 // pred_fallthru
        _
    $region6: #{tpu_custom_call.1} parent=1 // loop_footer
      %s20 = sadd.s32 1, %s16
    $region7: #{tpu_custom_call.1} parent=1 // loop_footer_branch
      %15 = sbr.rel target = $region3
    $region8: #{tpu_custom_call.1} parent=1 // loop_exit
      _
    %861 = vsyncpa [#allocation3], 1
    %s862 = scalar_lea.sflag [#allocation3], 1
    %863 = vsyncpa %s862, 1
    %864 = vsyncpa [#allocation5], 1
    %s865 = scalar_lea.sflag [#allocation5], 1
    %866 = vsyncpa %s865, 1

</llo_original>
